<compile_context>
chip_gen: v7x
topology: tpu7x:2x2x1
jax: 0.10.0
libtpu: 0.0.40
codegen_flags: <defaults>
</compile_context>

<pallas_src>
import functools

import jax
import jax.numpy as jnp
from jax.experimental import pallas as pl
from jax.experimental.pallas import tpu as pltpu

LANES = 128      # vreg lane width
SUBLANES = 8     # f32 vreg sublane count


def _chip_config():
    """Returns (max_tile_rows, num_parallel, use_core_parallel) for this TPU."""
    kind = ""
    try:
        kind = jax.devices()[0].device_kind.lower()
    except Exception:
        pass
    if "v7" in kind:
        # 8 MiB buffers (16 MiB double-buffered < 32 MiB scoped VMEM); 2 TCs.
        return 16384, 2, True
    if "v6" in kind:
        # 8 MiB buffers; single TensorCore, so no chunk axis.
        return 16384, 1, False
    if "v4" in kind or "v5p" in kind:
        # Megacore chips: plain "parallel" semantics shard the chunk axis.
        return 16384, 2, False
    # v5e and unknown chips: 4 MiB buffers (16 MiB scoped-VMEM default).
    return 8192, 1, False


def _reduce_sum_kernel(x_ref, o_ref, acc_ref, *, acc_rows):
    # Grid = (parallel chunk p, streaming step i).  acc_ref is an
    # (acc_rows, 128) f32 accumulator resident across the inner (reduction)
    # axis; it is re-zeroed at i == 0 for every chunk.
    i = pl.program_id(1)

    @pl.when(i == 0)
    def _():
        acc_ref[...] = jnp.zeros_like(acc_ref)

    # (tile_rows, 128) -> (tile_rows // acc_rows, acc_rows, 128) regroups whole
    # (8, 128) hardware tiles, so it is a layout-preserving view (no VMEM
    # copy); the axis-0 sum is pure whole-vreg VPU adds — no per-step XLU
    # reduce and no masked 1-lane stores in the hot loop.
    tile = x_ref[...]
    acc_ref[...] += jnp.sum(tile.reshape(-1, acc_rows, LANES), axis=0)

    # Lane-dense, write-once output: one (acc_rows, 128) partial per chunk.
    @pl.when(i == pl.num_programs(1) - 1)
    def _():
        o_ref[...] = acc_ref[...]


def reduce_sum(a: jax.Array, *, max_tile_rows=None, num_parallel=None) -> jax.Array:
    """Full sum-reduction of a rank-3 float32 array, computed in Pallas."""
    assert a.ndim == 3, "ReduceSumModule expects a rank-3 input"
    flat = a.astype(jnp.float32).reshape(-1)
    total = flat.size
    if total == 0:
        return jnp.zeros((), jnp.float32)

    cfg_rows, cfg_par, core_parallel = _chip_config()
    tile_rows = cfg_rows if max_tile_rows is None else int(max_tile_rows)
    tile_rows = max(SUBLANES, (tile_rows // SUBLANES) * SUBLANES)
    n_par = cfg_par if num_parallel is None else int(num_parallel)
    n_par = max(1, n_par)

    rows = pl.cdiv(total, LANES)  # rows of the lane-dense (rows, 128) view

    if rows // tile_rows >= n_par:
        # Streaming path: the grid covers only full (tile_rows, 128) tiles;
        # the remainder is summed in the wrapper (fused slice+reduce).
        padded_rows = rows
    else:
        # Small input: one tile covering everything (rows rounded to sublanes).
        n_par = 1
        tile_rows = max(SUBLANES, pl.cdiv(rows, SUBLANES) * SUBLANES)
        padded_rows = tile_rows

    padded_total = padded_rows * LANES
    if padded_total != total:
        # TODO(synk): this pad is a full extra HBM pass; it now only triggers
        # for element counts not divisible by 128 (or tiny inputs).
        flat = jnp.pad(flat, (0, padded_total - total))
    x2d = flat.reshape(padded_rows, LANES)

    inner_steps = max(1, (padded_rows // tile_rows) // n_par)
    covered_rows = n_par * inner_steps * tile_rows

    # 8 independent accumulation chains when the tile is large enough.
    acc_rows = 8 * SUBLANES if tile_rows % (8 * SUBLANES) == 0 else SUBLANES

    if core_parallel and n_par == 2 and hasattr(pltpu, "CORE_PARALLEL"):
        # TODO(synk): verify via a trace that this shards the chunk axis across
        # both v7x TensorCores.
        dim_sem = (pltpu.CORE_PARALLEL, pltpu.ARBITRARY)
    else:
        dim_sem = ("parallel", "arbitrary")

    kernel = functools.partial(_reduce_sum_kernel, acc_rows=acc_rows)

    partials = pl.pallas_call(
        kernel,
        out_shape=jax.ShapeDtypeStruct((n_par, acc_rows, LANES), jnp.float32),
        grid_spec=pltpu.PrefetchScalarGridSpec(
            num_scalar_prefetch=0,
            grid=(n_par, inner_steps),
            in_specs=[
                pl.BlockSpec(
                    (tile_rows, LANES),
                    lambda p, i: (p * inner_steps + i, 0),
                ),
            ],
            # Leading dim squeezed: kernel sees an (acc_rows, 128) lane-dense
            # block, written once per parallel chunk.
            out_specs=pl.BlockSpec(
                (None, acc_rows, LANES), lambda p, i: (p, 0, 0)
            ),
            scratch_shapes=[pltpu.VMEM((acc_rows, LANES), jnp.float32)],
        ),
        compiler_params=pltpu.CompilerParams(
            dimension_semantics=dim_sem,
        ),
        cost_estimate=pl.CostEstimate(
            flops=covered_rows * LANES,
            transcendentals=0,
            bytes_accessed=covered_rows * LANES * 4
            + n_par * acc_rows * LANES * 4,
        ),
    )(x2d)

    result = jnp.sum(partials)
    if covered_rows < padded_rows:
        # Tail (< n_par tiles): the slice feeds a reduce so XLA fuses it — no
        # extra materialized copy, and it is tiny relative to the main stream.
        result = result + jnp.sum(x2d[covered_rows:, :])
    return result


def _check(result, x, name):
    ref = jnp.sum(x)
    tol = 1e-5 + 1e-6 * float(jnp.sum(jnp.abs(x)))
    assert jnp.abs(result - ref) <= tol, (name, result, ref, tol)


if __name__ == "__main__":
    # Rank-3 float32 inputs consistent with annotate_args([-1, -1, -1], f32).
    x = jax.random.normal(jax.random.PRNGKey(0), (2, 8, 32), dtype=jnp.float32)
    result = jax.block_until_ready(reduce_sum(x))
    _check(result, x, "small")

    # Exercise the multi-step streaming path (per-chunk accumulator reset,
    # write-once output, tail-in-wrapper) with tiny data via the overrides.
    x2 = jax.random.normal(jax.random.PRNGKey(1), (4, 32, 40), dtype=jnp.float32)
    _check(jax.block_until_ready(reduce_sum(x2, max_tile_rows=8)), x2, "stream")
    _check(jax.block_until_ready(reduce_sum(x2, max_tile_rows=8, num_parallel=2)),
           x2, "stream-2chunk")

    # Exercise the wide (64, 128) accumulator path.
    x3 = jax.random.normal(jax.random.PRNGKey(2), (8, 96, 128), dtype=jnp.float32)
    _check(jax.block_until_ready(reduce_sum(x3)), x3, "wide-acc")
    _check(jax.block_until_ready(reduce_sum(x3, max_tile_rows=64)), x3,
           "wide-acc-stream")

    print("KERNEL_OK")
</pallas_src>

<mosaic_0001>
module attributes {stable_mosaic.version = 11 : i64} {
  func.func @_reduce_sum_kernel(%arg0: i32, %arg1: i32, %arg2: memref<8x128xf32, #tpu.memory_space<vmem>>, %arg3: memref<1x8x128xf32, #tpu.memory_space<vmem>>, %arg4: memref<8x128xf32, #tpu.memory_space<vmem>>) attributes {dimension_semantics = [#tpu.dimension_semantics<parallel>, #tpu.dimension_semantics<arbitrary>], iteration_bounds = array<i64: 1, 1>, scalar_prefetch = 0 : i64, scratch_operands = 1 : i64, tpu.core_type = #tpu.core_type<tc>, window_params = [{transform_indices = @transform_0, window_bounds = array<i64: 8, 128>}, {transform_indices = @transform_1, window_bounds = array<i64: 1, 8, 128>}]} {
    %c0_i32 = arith.constant 0 : i32
    %0 = arith.cmpi eq, %arg1, %c0_i32 : i32
    %1 = arith.extui %0 : i1 to i32
    %c0_i32_0 = arith.constant 0 : i32
    %2 = arith.cmpi ne, %1, %c0_i32_0 : i32
    scf.if %2 {
      %cst_8 = arith.constant 0.000000e+00 : f32
      %12 = vector.broadcast %cst_8 : f32 to vector<8x128xf32>
      %c0_9 = arith.constant 0 : index
      %c0_10 = arith.constant 0 : index
      %13 = vector.load %arg4[%c0_9, %c0_10] : memref<8x128xf32, #tpu.memory_space<vmem>>, vector<8x128xf32>
      tpu.vector_store %arg4[%c0_9, %c0_10], %12 {strides = array<i32>} : memref<8x128xf32, #tpu.memory_space<vmem>>, vector<8x128xf32>,
    } else {
    }
    %c0 = arith.constant 0 : index
    %c0_1 = arith.constant 0 : index
    %3 = vector.load %arg2[%c0, %c0_1] : memref<8x128xf32, #tpu.memory_space<vmem>>, vector<8x128xf32>
    %c0_2 = arith.constant 0 : index
    %c0_3 = arith.constant 0 : index
    %4 = vector.load %arg4[%c0_2, %c0_3] : memref<8x128xf32, #tpu.memory_space<vmem>>, vector<8x128xf32>
    %5 = vector.shape_cast %3 : vector<8x128xf32> to vector<1x8x128xf32>
    %cst = arith.constant dense<0.000000e+00> : vector<8x128xf32>
    %6 = vector.multi_reduction <add>, %5, %cst [0] : vector<1x8x128xf32> to vector<8x128xf32>
    %7 = arith.addf %4, %6 : vector<8x128xf32>
    %c0_4 = arith.constant 0 : index
    %c0_5 = arith.constant 0 : index
    %8 = vector.load %arg4[%c0_4, %c0_5] : memref<8x128xf32, #tpu.memory_space<vmem>>, vector<8x128xf32>
    tpu.vector_store %arg4[%c0_4, %c0_5], %7 {strides = array<i32>} : memref<8x128xf32, #tpu.memory_space<vmem>>, vector<8x128xf32>,
    %c0_i32_6 = arith.constant 0 : i32
    %9 = arith.cmpi eq, %arg1, %c0_i32_6 : i32
    %10 = arith.extui %9 : i1 to i32
    %c0_i32_7 = arith.constant 0 : i32
    %11 = arith.cmpi ne, %10, %c0_i32_7 : i32
    scf.if %11 {
      %c0_8 = arith.constant 0 : index
      %c0_9 = arith.constant 0 : index
      %12 = vector.load %arg4[%c0_8, %c0_9] : memref<8x128xf32, #tpu.memory_space<vmem>>, vector<8x128xf32>
      %c0_10 = arith.constant 0 : index
      %c0_11 = arith.constant 0 : index
      %c0_12 = arith.constant 0 : index
      %13 = vector.load %arg3[%c0_10, %c0_11, %c0_12] : memref<1x8x128xf32, #tpu.memory_space<vmem>>, vector<1x8x128xf32>
      %14 = vector.shape_cast %13 : vector<1x8x128xf32> to vector<8x128xf32>
      %15 = vector.shape_cast %12 : vector<8x128xf32> to vector<1x8x128xf32>
      tpu.vector_store %arg3[%c0_10, %c0_11, %c0_12], %15 {strides = array<i32>} : memref<1x8x128xf32, #tpu.memory_space<vmem>>, vector<1x8x128xf32>,
    } else {
    }
    return
  }
  func.func @transform_0(%arg0: i32, %arg1: i32) -> (i32, i32) {
    %c1_i32 = arith.constant 1 : i32
    %0 = arith.muli %arg0, %c1_i32 : i32
    %1 = arith.addi %0, %arg1 : i32
    %c0_i32 = arith.constant 0 : i32
    %c0_i32_0 = arith.constant 0 : i32
    return %1, %c0_i32 : i32, i32
  }
  func.func @transform_1(%arg0: i32, %arg1: i32) -> (i32, i32, i32) {
    %c0_i32 = arith.constant 0 : i32
    %c0_i32_0 = arith.constant 0 : i32
    %c0_i32_1 = arith.constant 0 : i32
    return %arg0, %c0_i32, %c0_i32_0 : i32, i32, i32
  }
}

</mosaic_0001>

<llo_original>
// kernel: tpu_custom_call.1
$region0: #{tpu_custom_call.1}
  #allocation0 [shape = 'u32[]', space=smem, size = 0x4, offset = 0x4, fixed_abs, tag = 'smem constant byte address 0x4 - core index']
  #allocation1 [shape = 'u32[144,128]{1,0:T(1,128)}', space=vmem, size = 0x12000, scoped, tag = 'internal scratch']
  #allocation2 [shape = 'f32[8,128]{1,0:T(8,128)}', space=vmem, size = 0x1000, scoped, tag = 'scratch operand']
  %s0 = inlined_call_operand.hbm [shape: f32[8,128], index: 0, kind: input, shape index: {}]
  %s1 = inlined_call_operand.hbm [shape: f32[1,8,128], index: 1, kind: output, shape index: {}]
  %s2 = sld [smem:[#allocation0]]
  $region26: #{tpu_custom_call.1} parent=0
    _
  %s4 = ssub.s32 1, %s2
  %s5 = scalar_select 0, %s4, %s2
  $region1: #{tpu_custom_call.1} parent=0
    #allocation3 [shape = 'u8[4096]{0}', space=vmem, size = 0x1000, scoped, tag = 'input window, operand 0, single buffered']
    #allocation4 [shape = 's32[1]{0}', space=sflag, size = 0x4, scoped, tag = 'scoped memory for tpu_custom_call.1']
    #allocation5 [shape = 's32[1]{0}', space=sflag, size = 0x4, scoped, tag = 'scoped memory for tpu_custom_call.1']
    #allocation6 [shape = 'u8[4096]{0}', space=vmem, size = 0x1000, scoped, tag = 'output window, operand 0, single buffered']
    %6 = vsyncpa [#allocation4], 0
    %7 = vsyncpa [#allocation5], 0
    // Predicated region
    $region2: #{tpu_custom_call.1} parent=1 // pred_check
      _
    $region3: #{tpu_custom_call.1} parent=1 // pred_check_branch
      %9 = sbr.rel (0) target = $region5
    $region4: #{tpu_custom_call.1} parent=1 // pred_region
      %s10 = sadd.s32 0, 0
      %s12 = ssub.s32 128, 128
      %13 = vsyncadd [#allocation4], %s12
      %s14 = smul.addr %s10, 128
      %s15 = scalar_lea.hbm %s0, %s14
      %s17 = sshll.u32 [#allocation3], 4
      %s18 = int_to_ptr.vmem [resolvable:$true] %s17
      %20 = dma.hbm_to_vmem [thread:$0]  %s15, 128, %s18, [#allocation4]
    $region5: #{tpu_custom_call.1} parent=1 // pred_fallthru
      _
    // Predicated region
    $region6: #{tpu_custom_call.1} parent=1 // pred_check
      _
    $region7: #{tpu_custom_call.1} parent=1 // pred_check_branch
      %22 = sbr.rel (0) target = $region9
    $region8: #{tpu_custom_call.1} parent=1 // pred_region
      %23 = dma.done [#allocation4], 128
    $region9: #{tpu_custom_call.1} parent=1 // pred_fallthru
      _
    %s24 = sadd.s32 0, 0
    %p25 = scmp.eq.s32.totalorder 0, 0
    // Predicated region
    $region10: #{tpu_custom_call.1} parent=1 // pred_check
      %p26 = pneg %p25
    $region11: #{tpu_custom_call.1} parent=1 // pred_check_branch
      %28 = sbr.rel (%p26) target = $region13
    $region12: #{tpu_custom_call.1} parent=1 // pred_region
      %29 = vst [vmem:[#allocation2] sm:$0xff] 0.0
    $region13: #{tpu_custom_call.1} parent=1 // pred_fallthru
      _
    %v30 = vld [vmem:[#allocation3] sm:$0xff]
    %v31 = vld [vmem:[#allocation2] sm:$0xff]
    %v32 = vadd.f32 %v30, 0.0
    %v33 = vadd.f32 %v31, %v32
    %34 = vst [vmem:[#allocation2] sm:$0xff] %v33
    // Predicated region
    $region14: #{tpu_custom_call.1} parent=1 // pred_check
      %p35 = pneg %p25
    $region15: #{tpu_custom_call.1} parent=1 // pred_check_branch
      %37 = sbr.rel (%p35) target = $region17
    $region16: #{tpu_custom_call.1} parent=1 // pred_region
      %v38 = vld [vmem:[#allocation2] sm:$0xff]
      %39 = vst [vmem:[#allocation6] sm:$0xff] %v38
    $region17: #{tpu_custom_call.1} parent=1 // pred_fallthru
      _
    // Predicated region
    $region18: #{tpu_custom_call.1} parent=1 // pred_check
      _
    $region19: #{tpu_custom_call.1} parent=1 // pred_check_branch
      %41 = sbr.rel (0) target = $region21
    $region20: #{tpu_custom_call.1} parent=1 // pred_region
      %s43 = ssub.s32 128, 128
      %44 = vsyncadd [#allocation5], %s43
      %s46 = sshll.u32 [#allocation6], 4
      %s47 = int_to_ptr.vmem [resolvable:$true] %s46
      %49 = dma.vmem_to_hbm [thread:$0]  %s47, 128, %s1, [#allocation5]
    $region21: #{tpu_custom_call.1} parent=1 // pred_fallthru
      _
    // Predicated region
    $region22: #{tpu_custom_call.1} parent=1 // pred_check
      _
    $region23: #{tpu_custom_call.1} parent=1 // pred_check_branch
      %51 = sbr.rel (0) target = $region25
    $region24: #{tpu_custom_call.1} parent=1 // pred_region
      %52 = dma.done [#allocation5], 128
    $region25: #{tpu_custom_call.1} parent=1 // pred_fallthru
      _
    %53 = vsyncpa [#allocation4], 1
    %54 = vsyncpa [#allocation5], 1

</llo_original>
